<compile_context>
chip_gen: v7x
topology: tpu7x:2x2x1
jax: 0.10.0
libtpu: 0.0.40
codegen_flags: <defaults>
</compile_context>

<pallas_src>
import functools
import math

import jax
import jax.numpy as jnp
from jax.experimental import pallas as pl
from jax.experimental.pallas import tpu as pltpu

_NEG_BIG = -1e30
_VMEM_LIMIT = 48 * 1024 * 1024      # headroom below v7x's 64 MiB physical VMEM


def _round_up(x, m):
    return ((x + m - 1) // m) * m


def _pick_tile(n, max_tile, align, min_blocks=1):
    """Tile size (multiple of `align`) with bounded padding waste and, when
    requested, at least `min_blocks` grid blocks (v7x has 2 TensorCores)."""
    if n <= max_tile and min_blocks <= 1:
        return _round_up(n, align)
    nb = max(min_blocks, -(-n // max_tile))
    best_t, best_pad = None, None
    for extra in range(4):
        t = max(align, _round_up(-(-n // (nb + extra)), align))
        pad = _round_up(n, t) - n
        if best_pad is None or pad < best_pad:
            best_t, best_pad = t, pad
        if pad == 0:
            break
    return best_t


def _divisor_tile(n, max_tile, align):
    """Largest multiple of `align` that divides n (<= max_tile); falls back to the
    full dim when n is not `align`-aligned (single block, no padding needed)."""
    if n % align != 0:
        return n
    t = min(max_tile, n)
    t -= t % align
    while n % t != 0:
        t -= align
    return t


# ----------------------------------------------------------------------------
# Kernel 1: tiled no-bias GEMM (Q/K/V projections), bf16 MXU / f32 accumulate
# ----------------------------------------------------------------------------
def _matmul_kernel(x_ref, w_ref, o_ref, acc_ref):
    @pl.when(pl.program_id(2) == 0)
    def _():
        acc_ref[...] = jnp.zeros_like(acc_ref)

    acc_ref[...] += jnp.dot(x_ref[...].astype(jnp.bfloat16), w_ref[...],
                            preferred_element_type=jnp.float32)

    @pl.when(pl.program_id(2) == pl.num_programs(2) - 1)
    def _():
        o_ref[...] = acc_ref[...].astype(o_ref.dtype)


def linear_nobias(x, w_t, *, out_dtype=jnp.bfloat16,
                  tm_max=256, tn_max=256, tk_max=512):
    """x: (M, K); w_t: (K, N) bf16 in (in, out) layout.  Returns x @ w_t."""
    M, K = x.shape
    Kw, N = w_t.shape
    assert K == Kw

    tm = _pick_tile(M, tm_max, 8, min_blocks=2 if M >= 16 else 1)
    M_pad = _round_up(M, tm)
    tn = _divisor_tile(N, tn_max, 128)
    tk = _divisor_tile(K, tk_max, 128)
    if M_pad != M:
        x = jnp.pad(x, ((0, M_pad - M), (0, 0)))

    out = pl.pallas_call(
        _matmul_kernel,
        out_shape=jax.ShapeDtypeStruct((M_pad, N), out_dtype),
        grid_spec=pltpu.PrefetchScalarGridSpec(
            num_scalar_prefetch=0,
            grid=(M_pad // tm, N // tn, K // tk),
            in_specs=[
                pl.BlockSpec((tm, tk), lambda i, j, k: (i, k)),
                pl.BlockSpec((tk, tn), lambda i, j, k: (k, j)),
            ],
            out_specs=pl.BlockSpec((tm, tn), lambda i, j, k: (i, j)),
            scratch_shapes=[pltpu.VMEM((tm, tn), jnp.float32)],
        ),
        compiler_params=pltpu.CompilerParams(
            dimension_semantics=("parallel", "parallel", "arbitrary"),
            vmem_limit_bytes=_VMEM_LIMIT),
    )(x, w_t)

    return out[:M] if M_pad != M else out


# ----------------------------------------------------------------------------
# Kernel 2: multi-head attention with streamed KV and online softmax
# ----------------------------------------------------------------------------
def _attn_kernel(q_ref, k_ref, v_ref, o_ref, a_ref, mo_ref, lo_ref,
                 acc_ref, m_ref, l_ref, *,
                 num_heads, head_dim, kv_len, mask_kv, single_block):
    ki = pl.program_id(2)
    nk = pl.num_programs(2)
    tkv = k_ref.shape[1]

    @pl.when(ki == 0)
    def _():
        m_ref[...] = jnp.full_like(m_ref, _NEG_BIG)
        l_ref[...] = jnp.zeros_like(l_ref)
        acc_ref[...] = jnp.zeros_like(acc_ref)

    q = q_ref[0]          # (tq, H)  bf16; 1/sqrt(d) already folded into W_q
    k = k_ref[0]          # (tkv, H) bf16
    v = v_ref[0]          # (tkv, H) bf16

    if mask_kv:
        col = jax.lax.broadcasted_iota(jnp.int32, (q.shape[0], tkv), 1) + ki * tkv
        valid = col < kv_len

    # Static (trace-time) loop over heads; per-head slices are static lane slices.
    for head in range(num_heads):
        c0 = head * head_dim
        c1 = c0 + head_dim
        qh = q[:, c0:c1]
        kh = k[:, c0:c1]
        vh = v[:, c0:c1]

        s = jax.lax.dot_general(qh, kh, (((1,), (1,)), ((), ())),
                                preferred_element_type=jnp.float32)
        if mask_kv:
            s = jnp.where(valid, s, _NEG_BIG)

        m_prev = m_ref[head]                                   # (tq, 1)
        m_new = jnp.maximum(m_prev, jnp.max(s, axis=-1, keepdims=True))
        alpha = jnp.exp(m_prev - m_new)
        p = jnp.exp(s - m_new)                                 # (tq, tkv) f32
        l_new = alpha * l_ref[head] + jnp.sum(p, axis=-1, keepdims=True)

        # TODO(synk): attn_dropout is the identity in eval/inference mode.
        acc_ref[head] = alpha * acc_ref[head] + jnp.dot(
            p.astype(v.dtype), vh, preferred_element_type=jnp.float32)
        m_ref[head] = m_new
        l_ref[head] = l_new

        if single_block:
            # Single KV block: running max / denominator are already final, so the
            # normalized probabilities can be written directly (no rescale pass).
            a_ref[head, 0] = (p * pl.reciprocal(l_new, approx=True)
                              ).astype(a_ref.dtype)
        else:
            # Streamed KV: stash raw (masked) scores blockwise; the cheap
            # elementwise softmax finalize runs in the wrapper from (m, l).
            a_ref[head, 0] = s.astype(a_ref.dtype)

    @pl.when(ki == nk - 1)
    def _():
        parts = []
        for head in range(num_heads):
            inv_l = pl.reciprocal(l_ref[head], approx=True)
            parts.append(acc_ref[head] * inv_l)
            mo_ref[head, 0] = m_ref[head]
            lo_ref[head, 0] = l_ref[head]
        # Assemble all heads into one lane-dense (tq, H) store (no merge transpose).
        o_ref[0] = jnp.concatenate(parts, axis=-1).astype(o_ref.dtype)


def multihead_attention(q, k, v, *, num_heads, out_dtype=jnp.bfloat16,
                        attn_dtype=jnp.float32, kv_tile=512):
    """q: (B, Sq, H); k, v: (B, Sk, H) in bf16.
    Returns (ctx (B, Sq, H) out_dtype, attn (num_heads*B, Sq, Sk) attn_dtype)."""
    B, Sq, H = q.shape
    Sk = k.shape[1]
    d = H // num_heads

    if Sk <= kv_tile:
        tkv, Sk_pad = Sk, Sk
    else:
        tkv = kv_tile
        Sk_pad = _round_up(Sk, tkv)
    nk = Sk_pad // tkv

    # Bound the per-step (h, tq, tkv) score-block footprint (double-buffered) and
    # keep vreg pressure manageable while KV is streamed.
    q_tile_max = 128 if nk > 1 else 256
    tq_cap = max(8, (((12 << 20) // (num_heads * tkv * 8)) // 8) * 8)
    minb = 2 if (B == 1 and Sq >= 16) else 1          # >=2 parallel blocks for v7x
    tq = min(_pick_tile(Sq, q_tile_max, 8, min_blocks=minb), tq_cap)
    Sq_pad = _round_up(Sq, tq)
    nq = Sq_pad // tq

    if Sq_pad != Sq:
        q = jnp.pad(q, ((0, 0), (0, Sq_pad - Sq), (0, 0)))
    if Sk_pad != Sk:
        k = jnp.pad(k, ((0, 0), (0, Sk_pad - Sk), (0, 0)))
        v = jnp.pad(v, ((0, 0), (0, Sk_pad - Sk), (0, 0)))

    kernel = functools.partial(
        _attn_kernel, num_heads=num_heads, head_dim=d, kv_len=Sk,
        mask_kv=(Sk_pad != Sk), single_block=(nk == 1))

    out, scores, m_out, l_out = pl.pallas_call(
        kernel,
        out_shape=(
            jax.ShapeDtypeStruct((B, Sq_pad, H), out_dtype),
            jax.ShapeDtypeStruct((num_heads, B, Sq_pad, Sk_pad), attn_dtype),
            jax.ShapeDtypeStruct((num_heads, B, Sq_pad, 1), jnp.float32),
            jax.ShapeDtypeStruct((num_heads, B, Sq_pad, 1), jnp.float32),
        ),
        grid_spec=pltpu.PrefetchScalarGridSpec(
            num_scalar_prefetch=0,
            grid=(B, nq, nk),
            in_specs=[
                pl.BlockSpec((1, tq, H), lambda b, qi, ki: (b, qi, 0)),
                pl.BlockSpec((1, tkv, H), lambda b, qi, ki: (b, ki, 0)),
                pl.BlockSpec((1, tkv, H), lambda b, qi, ki: (b, ki, 0)),
            ],
            out_specs=[
                pl.BlockSpec((1, tq, H), lambda b, qi, ki: (b, qi, 0)),
                pl.BlockSpec((num_heads, 1, tq, tkv),
                             lambda b, qi, ki: (0, b, qi, ki)),
                pl.BlockSpec((num_heads, 1, tq, 1),
                             lambda b, qi, ki: (0, b, qi, 0)),
                pl.BlockSpec((num_heads, 1, tq, 1),
                             lambda b, qi, ki: (0, b, qi, 0)),
            ],
            scratch_shapes=[
                pltpu.VMEM((num_heads, tq, d), jnp.float32),   # acc
                pltpu.VMEM((num_heads, tq, 1), jnp.float32),   # running max
                pltpu.VMEM((num_heads, tq, 1), jnp.float32),   # running sum
            ],
        ),
        compiler_params=pltpu.CompilerParams(
            dimension_semantics=("parallel", "parallel", "arbitrary"),
            vmem_limit_bytes=_VMEM_LIMIT),
    )(q, k, v)

    out = out[:, :Sq, :]
    scores = scores[:, :, :Sq, :Sk]
    if nk == 1:
        attns = scores                       # kernel already wrote softmax probs
    else:
        m_out = m_out[:, :, :Sq, :]
        l_out = l_out[:, :, :Sq, :]
        # Cheap elementwise finalize of the blockwise-emitted raw scores.
        attns = (jnp.exp(scores - m_out) / l_out).astype(attn_dtype)
    return out, attns.reshape(num_heads * B, Sq, Sk)


# ----------------------------------------------------------------------------
# Kernel 3: fused  concat -> final_linear -> +residual -> LayerNorm (K-tiled)
# ----------------------------------------------------------------------------
def _final_kernel(resk_ref, attk_ref, wr_ref, wa_ref, res_ref, b_ref, g_ref,
                  beta_ref, o_ref, acc_ref, *, eps):
    kk = pl.program_id(1)

    @pl.when(kk == 0)
    def _():
        acc_ref[...] = jnp.zeros_like(acc_ref)

    acc_ref[...] += (
        jnp.dot(resk_ref[...].astype(jnp.bfloat16), wr_ref[...],
                preferred_element_type=jnp.float32)
        + jnp.dot(attk_ref[...].astype(jnp.bfloat16), wa_ref[...],
                  preferred_element_type=jnp.float32))

    @pl.when(kk == pl.num_programs(1) - 1)
    def _():
        # TODO(synk): residual_dropout is the identity in eval/inference mode.
        y = acc_ref[...] + b_ref[...] + res_ref[...].astype(jnp.float32)
        mean = jnp.mean(y, axis=-1, keepdims=True)
        cent = y - mean
        var = jnp.mean(cent * cent, axis=-1, keepdims=True)
        yn = cent * jax.lax.rsqrt(var + eps)
        o_ref[...] = (yn * g_ref[...] + beta_ref[...]).astype(o_ref.dtype)


def final_block(residual2d, ctx2d, w_res_t, w_att_t, bias, gamma, beta, *,
                eps=1e-5, out_dtype=None):
    """residual2d (M, H) f32, ctx2d (M, H) bf16, weights (H, H) bf16 (in,out)."""
    M, H = residual2d.shape
    out_dtype = out_dtype or residual2d.dtype

    tm = _pick_tile(M, 256, 8, min_blocks=2 if M >= 16 else 1)
    M_pad = _round_up(M, tm)
    tk = _divisor_tile(H, 512, 128)
    if M_pad != M:
        residual2d = jnp.pad(residual2d, ((0, M_pad - M), (0, 0)))
        ctx2d = jnp.pad(ctx2d, ((0, M_pad - M), (0, 0)))

    kernel = functools.partial(_final_kernel, eps=eps)
    out = pl.pallas_call(
        kernel,
        out_shape=jax.ShapeDtypeStruct((M_pad, H), out_dtype),
        grid_spec=pltpu.PrefetchScalarGridSpec(
            num_scalar_prefetch=0,
            grid=(M_pad // tm, H // tk),
            in_specs=[
                pl.BlockSpec((tm, tk), lambda i, k: (i, k)),   # residual, K tile
                pl.BlockSpec((tm, tk), lambda i, k: (i, k)),   # ctx, K tile
                pl.BlockSpec((tk, H), lambda i, k: (k, 0)),    # W_res K slab
                pl.BlockSpec((tk, H), lambda i, k: (k, 0)),    # W_att K slab
                pl.BlockSpec((tm, H), lambda i, k: (i, 0)),    # residual (epilogue)
                pl.BlockSpec((1, H), lambda i, k: (0, 0)),     # bias
                pl.BlockSpec((1, H), lambda i, k: (0, 0)),     # gamma
                pl.BlockSpec((1, H), lambda i, k: (0, 0)),     # beta
            ],
            out_specs=pl.BlockSpec((tm, H), lambda i, k: (i, 0)),
            scratch_shapes=[pltpu.VMEM((tm, H), jnp.float32)],
        ),
        compiler_params=pltpu.CompilerParams(
            dimension_semantics=("parallel", "arbitrary"),
            vmem_limit_bytes=_VMEM_LIMIT),
    )(residual2d, ctx2d, w_res_t, w_att_t, residual2d, bias, gamma, beta)

    return out[:M] if M_pad != M else out


# ----------------------------------------------------------------------------
# Parameter preparation + full Attention forward
# ----------------------------------------------------------------------------
def prepare_params(params, num_heads, compute_dtype=jnp.bfloat16):
    """One-time conversion of PyTorch-convention parameters into the layout the
    kernels consume: pre-transposed (in, out) weights, pre-split final weight
    (implicit concat), 1/sqrt(d) folded into W_q, bf16 MXU operands, (1, H) f32
    bias/LayerNorm rows.  Done once, not per forward call."""
    H = params['w_key'].shape[0]
    d = H // num_heads
    scale = 1.0 / math.sqrt(d)
    f32 = jnp.float32
    return dict(
        wk_t=params['w_key'].astype(f32).T.astype(compute_dtype),
        wv_t=params['w_value'].astype(f32).T.astype(compute_dtype),
        wq_t=(params['w_query'].astype(f32).T * scale).astype(compute_dtype),
        w_res_t=params['w_final'][:, :H].astype(f32).T.astype(compute_dtype),
        w_att_t=params['w_final'][:, H:].astype(f32).T.astype(compute_dtype),
        b_final=params['b_final'].astype(f32).reshape(1, H),
        ln_gamma=params['ln_gamma'].astype(f32).reshape(1, H),
        ln_beta=params['ln_beta'].astype(f32).reshape(1, H),
    )


def attention_forward(key_x, value_x, query_x, prep, num_heads):
    """Mirrors Attention.forward(key, value, query) -> (result, attns)."""
    B, Sk, H = key_x.shape
    Sq = query_x.shape[1]

    # Q/K/V projections (bias=False).  Outputs stay in (B, S, H) layout so no
    # head-split transposes are materialized in HBM.
    k2 = linear_nobias(key_x.reshape(-1, H), prep['wk_t']).reshape(B, Sk, H)
    v2 = linear_nobias(value_x.reshape(-1, H), prep['wv_t']).reshape(B, Sk, H)
    q2 = linear_nobias(query_x.reshape(-1, H), prep['wq_t']).reshape(B, Sq, H)

    ctx, attns = multihead_attention(q2, k2, v2, num_heads=num_heads)

    out = final_block(query_x.reshape(-1, H), ctx.reshape(-1, H),
                      prep['w_res_t'], prep['w_att_t'], prep['b_final'],
                      prep['ln_gamma'], prep['ln_beta'],
                      out_dtype=query_x.dtype)
    return out.reshape(B, Sq, H), attns


# ----------------------------------------------------------------------------
# Parameter init (mirrors Linear + xavier_uniform_ and nn.LayerNorm defaults)
# ----------------------------------------------------------------------------
def init_attention_params(key, hidden_dim, dtype=jnp.float32):
    gain = 1.0  # calculate_gain('linear')
    ks = jax.random.split(key, 5)

    def xavier(k, out_d, in_d):
        bound = gain * math.sqrt(6.0 / (in_d + out_d))
        return jax.random.uniform(k, (out_d, in_d), dtype, -bound, bound)

    w_key = xavier(ks[0], hidden_dim, hidden_dim)
    w_value = xavier(ks[1], hidden_dim, hidden_dim)
    w_query = xavier(ks[2], hidden_dim, hidden_dim)
    w_final = xavier(ks[3], hidden_dim, 2 * hidden_dim)
    bound_b = 1.0 / math.sqrt(2 * hidden_dim)
    b_final = jax.random.uniform(ks[4], (hidden_dim,), dtype, -bound_b, bound_b)
    return dict(w_key=w_key, w_value=w_value, w_query=w_query,
                w_final=w_final, b_final=b_final,
                ln_gamma=jnp.ones((hidden_dim,), dtype),
                ln_beta=jnp.zeros((hidden_dim,), dtype))


# ----------------------------------------------------------------------------
# Pure-JAX reference for correctness check
# ----------------------------------------------------------------------------
def attention_reference(key_x, value_x, query_x, params, num_heads):
    B, Sk, H = key_x.shape
    Sq = query_x.shape[1]
    d = H // num_heads
    hp = jax.lax.Precision.HIGHEST
    residual = query_x

    k = jnp.matmul(key_x, params['w_key'].T, precision=hp)
    v = jnp.matmul(value_x, params['w_value'].T, precision=hp)
    q = jnp.matmul(query_x, params['w_query'].T, precision=hp)

    def sh(x, S):
        return (x.reshape(B, S, num_heads, d).transpose(2, 0, 1, 3)
                 .reshape(num_heads * B, S, d))

    k, v, q = sh(k, Sk), sh(v, Sk), sh(q, Sq)
    scores = jnp.einsum('gqd,gkd->gqk', q, k, precision=hp) / math.sqrt(d)
    attn = jax.nn.softmax(scores, axis=-1)
    res = jnp.einsum('gqk,gkd->gqd', attn, v, precision=hp)
    res = (res.reshape(num_heads, B, Sq, d).transpose(1, 2, 0, 3)
              .reshape(B, Sq, H))

    cat = jnp.concatenate([residual, res], axis=-1)
    y = jnp.matmul(cat, params['w_final'].T, precision=hp) + params['b_final']
    y = y + residual
    mean = y.mean(-1, keepdims=True)
    var = ((y - mean) ** 2).mean(-1, keepdims=True)
    y = (y - mean) / jnp.sqrt(var + 1e-5)
    return y * params['ln_gamma'] + params['ln_beta'], attn


def _run_case(rng, batch, seq_q, seq_kv, hidden, heads, out_tol, attn_tol):
    kk, kvk, kq, kp = jax.random.split(rng, 4)
    key_x = jax.random.normal(kk, (batch, seq_kv, hidden), jnp.float32)
    value_x = jax.random.normal(kvk, (batch, seq_kv, hidden), jnp.float32)
    query_x = jax.random.normal(kq, (batch, seq_q, hidden), jnp.float32)

    raw = init_attention_params(kp, hidden)
    prep = prepare_params(raw, heads)

    out, attn = attention_forward(key_x, value_x, query_x, prep, heads)
    jax.block_until_ready((out, attn))

    ref_out, ref_attn = attention_reference(key_x, value_x, query_x, raw, heads)
    assert out.shape == (batch, seq_q, hidden)
    assert attn.shape == (heads * batch, seq_q, seq_kv)
    # bf16 MXU operands (with f32 accumulation) are used on purpose; tolerances
    # are loosened accordingly vs the f32-HIGHEST reference.
    assert jnp.allclose(out, ref_out, atol=out_tol, rtol=out_tol), \
        float(jnp.max(jnp.abs(out - ref_out)))
    assert jnp.allclose(attn.astype(jnp.float32), ref_attn,
                        atol=attn_tol, rtol=attn_tol), \
        float(jnp.max(jnp.abs(attn.astype(jnp.float32) - ref_attn)))


if __name__ == "__main__":
    root = jax.random.PRNGKey(0)
    r1, r2 = jax.random.split(root)

    # Case 1: small shapes (single KV block path, normalized attn in-kernel).
    _run_case(r1, batch=2, seq_q=16, seq_kv=16, hidden=128, heads=4,
              out_tol=5e-2, attn_tol=2e-2)

    # Case 2: exercises the streamed-KV path (nk > 1), padded-KV masking,
    # multi-block M tiles and the wrapper-side softmax finalize.
    _run_case(r2, batch=1, seq_q=64, seq_kv=640, hidden=128, heads=4,
              out_tol=5e-2, attn_tol=2e-2)

    print("KERNEL_OK")
</pallas_src>

<mosaic_0001>
module attributes {stable_mosaic.version = 11 : i64} {
  func.func @_matmul_kernel(%arg0: i32, %arg1: i32, %arg2: i32, %arg3: memref<16x128xf32, #tpu.memory_space<vmem>>, %arg4: memref<128x128xbf16, #tpu.memory_space<vmem>>, %arg5: memref<16x128xbf16, #tpu.memory_space<vmem>>, %arg6: memref<16x128xf32, #tpu.memory_space<vmem>>) attributes {dimension_semantics = [#tpu.dimension_semantics<parallel>, #tpu.dimension_semantics<parallel>, #tpu.dimension_semantics<arbitrary>], iteration_bounds = array<i64: 2, 1, 1>, scalar_prefetch = 0 : i64, scratch_operands = 1 : i64, tpu.core_type = #tpu.core_type<tc>, window_params = [{transform_indices = @transform_0, window_bounds = array<i64: 16, 128>}, {transform_indices = @transform_1, window_bounds = array<i64: 128, 128>}, {transform_indices = @transform_2, window_bounds = array<i64: 16, 128>}]} {
    %c0_i32 = arith.constant 0 : i32
    %0 = arith.cmpi eq, %arg2, %c0_i32 : i32
    %1 = arith.extui %0 : i1 to i32
    %c0_i32_0 = arith.constant 0 : i32
    %2 = arith.cmpi ne, %1, %c0_i32_0 : i32
    scf.if %2 {
      %cst_10 = arith.constant 0.000000e+00 : f32
      %13 = vector.broadcast %cst_10 : f32 to vector<16x128xf32>
      %c0_11 = arith.constant 0 : index
      %c0_12 = arith.constant 0 : index
      %14 = vector.load %arg6[%c0_11, %c0_12] : memref<16x128xf32, #tpu.memory_space<vmem>>, vector<16x128xf32>
      tpu.vector_store %arg6[%c0_11, %c0_12], %13 {strides = array<i32>} : memref<16x128xf32, #tpu.memory_space<vmem>>, vector<16x128xf32>,
    } else {
    }
    %c0 = arith.constant 0 : index
    %c0_1 = arith.constant 0 : index
    %3 = vector.load %arg6[%c0, %c0_1] : memref<16x128xf32, #tpu.memory_space<vmem>>, vector<16x128xf32>
    %c0_2 = arith.constant 0 : index
    %c0_3 = arith.constant 0 : index
    %4 = vector.load %arg3[%c0_2, %c0_3] : memref<16x128xf32, #tpu.memory_space<vmem>>, vector<16x128xf32>
    %5 = arith.truncf %4 : vector<16x128xf32> to vector<16x128xbf16>
    %c0_4 = arith.constant 0 : index
    %c0_5 = arith.constant 0 : index
    %6 = vector.load %arg4[%c0_4, %c0_5] : memref<128x128xbf16, #tpu.memory_space<vmem>>, vector<128x128xbf16>
    %cst = arith.constant dense<0.000000e+00> : vector<16x128xf32>
    %7 = tpu.matmul %5, %6, %cst {dimension_numbers = #tpu.dot_dimension_numbers<[1], [0], [0], [1], [0, 0, 1, 1], [], []>} : vector<16x128xbf16>, vector<128x128xbf16>, vector<16x128xf32> -> vector<16x128xf32>
    %8 = arith.addf %3, %7 : vector<16x128xf32>
    %c0_6 = arith.constant 0 : index
    %c0_7 = arith.constant 0 : index
    %9 = vector.load %arg6[%c0_6, %c0_7] : memref<16x128xf32, #tpu.memory_space<vmem>>, vector<16x128xf32>
    tpu.vector_store %arg6[%c0_6, %c0_7], %8 {strides = array<i32>} : memref<16x128xf32, #tpu.memory_space<vmem>>, vector<16x128xf32>,
    %c0_i32_8 = arith.constant 0 : i32
    %10 = arith.cmpi eq, %arg2, %c0_i32_8 : i32
    %11 = arith.extui %10 : i1 to i32
    %c0_i32_9 = arith.constant 0 : i32
    %12 = arith.cmpi ne, %11, %c0_i32_9 : i32
    scf.if %12 {
      %c0_10 = arith.constant 0 : index
      %c0_11 = arith.constant 0 : index
      %13 = vector.load %arg6[%c0_10, %c0_11] : memref<16x128xf32, #tpu.memory_space<vmem>>, vector<16x128xf32>
      %14 = arith.truncf %13 : vector<16x128xf32> to vector<16x128xbf16>
      %c0_12 = arith.constant 0 : index
      %c0_13 = arith.constant 0 : index
      %15 = vector.load %arg5[%c0_12, %c0_13] : memref<16x128xbf16, #tpu.memory_space<vmem>>, vector<16x128xbf16>
      tpu.vector_store %arg5[%c0_12, %c0_13], %14 {strides = array<i32>} : memref<16x128xbf16, #tpu.memory_space<vmem>>, vector<16x128xbf16>,
    } else {
    }
    return
  }
  func.func @transform_0(%arg0: i32, %arg1: i32, %arg2: i32) -> (i32, i32) {
    %c0_i32 = arith.constant 0 : i32
    return %arg0, %arg2 : i32, i32
  }
  func.func @transform_1(%arg0: i32, %arg1: i32, %arg2: i32) -> (i32, i32) {
    %c0_i32 = arith.constant 0 : i32
    return %arg2, %arg1 : i32, i32
  }
  func.func @transform_2(%arg0: i32, %arg1: i32, %arg2: i32) -> (i32, i32) {
    %c0_i32 = arith.constant 0 : i32
    return %arg0, %arg1 : i32, i32
  }
}

</mosaic_0001>

<llo_original>
// kernel: tpu_custom_call.1
$region0: #{tpu_custom_call.1}
  #allocation0 [shape = 'u32[]', space=smem, size = 0x4, offset = 0x4, fixed_abs, tag = 'smem constant byte address 0x4 - core index']
  #allocation1 [shape = 'u32[144,128]{1,0:T(1,128)}', space=vmem, size = 0x12000, scoped, tag = 'internal scratch']
  #allocation2 [shape = 'f32[16,128]{1,0:T(8,128)}', space=vmem, size = 0x2000, scoped, tag = 'scratch operand']
  %s0 = inlined_call_operand.hbm [shape: f32[32,128], index: 0, kind: input, shape index: {}]
  %s1 = inlined_call_operand.hbm [shape: bf16[128,128], index: 1, kind: input, shape index: {}]
  %s2 = inlined_call_operand.hbm [shape: bf16[32,128], index: 2, kind: output, shape index: {}]
  %s3 = sld [smem:[#allocation0]]
  $region57: #{tpu_custom_call.1} parent=0
    _
  %s5 = ssub.s32 1, %s3
  %s6 = scalar_select 0, %s5, %s3
  $region1: #{tpu_custom_call.1} parent=0
    #allocation3 [shape = 'u8[16384]{0}', space=vmem, size = 0x4000, scoped, tag = 'input window, operand 0']
    #allocation4 [shape = 's32[2]{0}', space=sflag, size = 0x8, scoped, tag = 'scoped memory for tpu_custom_call.1']
    #allocation5 [shape = 's32[2]{0}', space=sflag, size = 0x8, scoped, tag = 'scoped memory for tpu_custom_call.1']
    #allocation6 [shape = 'u8[32768]{0}', space=vmem, size = 0x8000, scoped, tag = 'input window, operand 1, single buffered']
    #allocation7 [shape = 's32[1]{0}', space=sflag, size = 0x4, scoped, tag = 'scoped memory for tpu_custom_call.1']
    #allocation8 [shape = 'u8[8192]{0}', space=vmem, size = 0x2000, scoped, tag = 'output window, operand 0']
    %7 = vsyncpa [#allocation4], 0
    %s8 = scalar_lea.sflag [#allocation4], 1
    %9 = vsyncpa %s8, 0
    %10 = vsyncpa [#allocation7], 0
    %11 = vsyncpa [#allocation5], 0
    %s12 = scalar_lea.sflag [#allocation5], 1
    %13 = vsyncpa %s12, 0
    loop: start=0, step=1, limit=4
    $region2: #{tpu_custom_call.1} parent=1 // loop_pre_header
      _
    $region3: #{tpu_custom_call.1} parent=1 // loop_header
      %s15 = sphi 0, %s19
      %p16 = scmp.ge.s32.totalorder %s15, 4
      %s22 = sphi 0, %s41
      %s23 = sphi 0, %s37
      %s24 = sphi 0, %s33
      %s25 = sphi 0, %s22
      %s26 = sphi 0, %s23
      %s27 = sphi 0, %s24
      %s28 = sphi 0, %s25
      %s29 = sphi 0, %s26
      %s30 = sphi 0, %s27
      %s46 = sphi 0, %s48
      %s49 = sphi 0, %s46
      %s50 = sphi 0, %s49
      %s66 = sphi 0, %s50
      %s74 = sphi 0, %s76
      %s77 = sphi 0, %s74
      %s78 = sphi 0, %s77
      %s94 = sphi 0, %s78
      %s102 = sphi 0, %s104
      %s105 = sphi 0, %s102
      %s106 = sphi 0, %s105
      %s122 = sphi 0, %s106
    $region4: #{tpu_custom_call.1} parent=1 // loop_header_branch
      %18 = sbr.rel (%p16) target = $region8
    $region5: #{tpu_custom_call.1} parent=1 // loop_body
      %s20 = ssub.s32 %s15, 1
      %s21 = ssub.s32 %s15, 2
      %s31 = sadd.s32 1, %s24
      %p32 = scmp.ge.s32.totalorder %s31, 1
      %s33 = scalar_select %p32, 0, %s31
      %s34 = sadd.s32 1, %s23
      %s35 = scalar_select %p32, %s34, %s23
      %p36 = scmp.ge.s32.totalorder %s35, 1
      %s37 = scalar_select %p36, 0, %s35
      %s38 = sadd.s32 1, %s22
      %s39 = scalar_select %p36, %s38, %s22
      %p40 = scmp.ge.s32.totalorder %s39, 2
      %s41 = scalar_select %p40, 0, %s39
      %s42 = ssub.s32 %s22, %s41
      %s43 = ssub.s32 %s24, %s33
      %s44 = sor.u32 %s42, %s43
      %p45 = scmp.eq.s32.totalorder %s44, 0
      %s47 = sadd.s32 %s46, 1
      %s48 = scalar_select %p45, %s46, %s47
      %p51 = pneg %p45
      %p52 = scmp.eq.s32.totalorder %s15, 1
      %p53 = por %p51, %p52
      %p54 = scmp.ne.s32.totalorder %s46, %s49
      %p55 = scmp.eq.s32.totalorder %s15, 0
      %p56 = por %p54, %p55
      %p57 = scmp.ne.s32.totalorder %s46, %s49
      %p58 = scmp.eq.s32.totalorder %s20, 1
      %p59 = por %p57, %p58
      %p60 = scmp.ne.s32.totalorder %s49, %s50
      %p61 = scmp.eq.s32.totalorder %s20, 0
      %p62 = por %p60, %p61
      %p63 = scmp.ne.s32.totalorder %s49, %s50
      %p64 = scmp.eq.s32.totalorder %s21, 1
      %p65 = por %p63, %p64
      %p67 = scmp.ne.s32.totalorder %s50, %s66
      %p68 = scmp.eq.s32.totalorder %s21, 0
      %p69 = por %p67, %p68
      %s70 = ssub.s32 %s24, %s33
      %s71 = ssub.s32 %s23, %s37
      %s72 = sor.u32 %s70, %s71
      %p73 = scmp.eq.s32.totalorder %s72, 0
      %s75 = sadd.s32 %s74, 1
      %s76 = scalar_select %p73, %s74, %s75
      %p79 = pneg %p73
      %p80 = scmp.eq.s32.totalorder %s15, 1
      %p81 = por %p79, %p80
      %p82 = scmp.ne.s32.totalorder %s74, %s77
      %p83 = scmp.eq.s32.totalorder %s15, 0
      %p84 = por %p82, %p83
      %p85 = scmp.ne.s32.totalorder %s74, %s77
      %p86 = scmp.eq.s32.totalorder %s20, 1
      %p87 = por %p85, %p86
      %p88 = scmp.ne.s32.totalorder %s77, %s78
      %p89 = scmp.eq.s32.totalorder %s20, 0
      %p90 = por %p88, %p89
      %p91 = scmp.ne.s32.totalorder %s77, %s78
      %p92 = scmp.eq.s32.totalorder %s21, 1
      %p93 = por %p91, %p92
      %p95 = scmp.ne.s32.totalorder %s78, %s94
      %p96 = scmp.eq.s32.totalorder %s21, 0
      %p97 = por %p95, %p96
      %s98 = ssub.s32 %s22, %s41
      %s99 = ssub.s32 %s23, %s37
      %s100 = sor.u32 %s98, %s99
      %p101 = scmp.eq.s32.totalorder %s100, 0
      %s103 = sadd.s32 %s102, 1
      %s104 = scalar_select %p101, %s102, %s103
      %p107 = pneg %p101
      %p108 = scmp.eq.s32.totalorder %s15, 1
      %p109 = por %p107, %p108
      %p110 = scmp.ne.s32.totalorder %s102, %s105
      %p111 = scmp.eq.s32.totalorder %s15, 0
      %p112 = por %p110, %p111
      %p113 = scmp.ne.s32.totalorder %s102, %s105
      %p114 = scmp.eq.s32.totalorder %s20, 1
      %p115 = por %p113, %p114
      %p116 = scmp.ne.s32.totalorder %s105, %s106
      %p117 = scmp.eq.s32.totalorder %s20, 0
      %p118 = por %p116, %p117
      %p119 = scmp.ne.s32.totalorder %s105, %s106
      %p120 = scmp.eq.s32.totalorder %s21, 1
      %p121 = por %p119, %p120
      %p123 = scmp.ne.s32.totalorder %s106, %s122
      %p124 = scmp.eq.s32.totalorder %s21, 0
      %p125 = por %p123, %p124
      %p126 = scmp.le.s32.totalorder 1, %s15
      %p127 = scmp.lt.s32.totalorder %s15, 3
      %p128 = pnand %p126, %p127
      %p129 = pneg %p128
      // Predicated region
      $region9: #{tpu_custom_call.1} parent=5 // pred_check
        _
      $region10: #{tpu_custom_call.1} parent=5 // pred_check_branch
        %131 = sbr.rel (%p128) target = $region12
      $region11: #{tpu_custom_call.1} parent=5 // pred_region
        %s132 = ssub.s32 %s15, 1
        // Predicated region
        $region13: #{tpu_custom_call.1} parent=11 // pred_check
          %p133 = pneg %p90
        $region14: #{tpu_custom_call.1} parent=11 // pred_check_branch
          %135 = sbr.rel (%p133) target = $region16
        $region15: #{tpu_custom_call.1} parent=11 // pred_region
          %s136 = smul.u32 16, %s27
          %s138 = ssub.s32 1024, 1024
          %139 = vsyncadd [#allocation7], %s138
          %s140 = sadd.s32 %s26, %s136
          %s141 = smul.addr %s140, 64
          %s142 = scalar_lea.hbm %s1, %s141
          %s143 = sshll.u32 [#allocation6], 4
          %s144 = int_to_ptr.vmem [resolvable:$true] %s143
          %149 = dma.hbm_to_vmem [thread:$0]  %s142, 1024, %s144, [#allocation7], 64, 64, 4
        $region16: #{tpu_custom_call.1} parent=11 // pred_fallthru
          _
      $region12: #{tpu_custom_call.1} parent=5 // pred_fallthru
        _
      %p150 = scmp.lt.s32.totalorder %s15, 2
      // Predicated region
      $region17: #{tpu_custom_call.1} parent=5 // pred_check
        %p151 = pneg %p150
      $region18: #{tpu_custom_call.1} parent=5 // pred_check_branch
        %153 = sbr.rel (%p151) target = $region20
      $region19: #{tpu_custom_call.1} parent=5 // pred_region
        // Predicated region
        $region21: #{tpu_custom_call.1} parent=19 // pred_check
          %p154 = pneg %p56
        $region22: #{tpu_custom_call.1} parent=19 // pred_check_branch
          %156 = sbr.rel (%p154) target = $region24
        $region23: #{tpu_custom_call.1} parent=19 // pred_region
          %s157 = sand.u32 %s46, 1
          %s158 = scalar_lea.sflag [#allocation4], %s157
          %s159 = sand.u32 %s46, 1
          %s160 = smul.addr %s159, 16
          %s161 = scalar_lea.vmem [#allocation3], %s160
          %s162 = smul.u32 2, %s22
          %s164 = ssub.s32 256, 256
          %165 = vsyncadd %s158, %s164
          %s166 = sadd.s32 %s24, %s162
          %s167 = smul.addr %s166, 128
          %s168 = scalar_lea.hbm %s0, %s167
          %s169 = sshll.u32 %s161, 4
          %s170 = int_to_ptr.vmem [resolvable:$true] %s169
          %175 = dma.hbm_to_vmem [thread:$0]  %s168, 256, %s170, %s158, 128, 128, 8
        $region24: #{tpu_custom_call.1} parent=19 // pred_fallthru
          _
      $region20: #{tpu_custom_call.1} parent=5 // pred_fallthru
        _
      %p176 = scmp.le.s32.totalorder 1, %s15
      %p177 = scmp.lt.s32.totalorder %s15, 3
      %p178 = pnand %p176, %p177
      %p179 = pneg %p178
      // Predicated region
      $region25: #{tpu_custom_call.1} parent=5 // pred_check
        _
      $region26: #{tpu_custom_call.1} parent=5 // pred_check_branch
        %181 = sbr.rel (%p178) target = $region28
      $region27: #{tpu_custom_call.1} parent=5 // pred_region
        %s182 = ssub.s32 %s15, 1
        %s183 = sand.u32 %s49, 1
        %s184 = scalar_lea.sflag [#allocation4], %s183
        %s185 = sand.u32 %s49, 1
        %s186 = smul.addr %s185, 16
        %s187 = scalar_lea.vmem [#allocation3], %s186
        // Predicated region
        $region29: #{tpu_custom_call.1} parent=27 // pred_check
          %p188 = pneg %p62
        $region30: #{tpu_custom_call.1} parent=27 // pred_check_branch
          %190 = sbr.rel (%p188) target = $region32
        $region31: #{tpu_custom_call.1} parent=27 // pred_region
          %191 = dma.done %s184, 256
        $region32: #{tpu_custom_call.1} parent=27 // pred_fallthru
          _
        // Predicated region
        $region33: #{tpu_custom_call.1} parent=27 // pred_check
          %p192 = pneg %p90
        $region34: #{tpu_custom_call.1} parent=27 // pred_check_branch
          %194 = sbr.rel (%p192) target = $region36
        $region35: #{tpu_custom_call.1} parent=27 // pred_region
          %195 = dma.done [#allocation7], 1024
        $region36: #{tpu_custom_call.1} parent=27 // pred_fallthru
          _
        %s196 = sand.u32 %s49, 1
        %s197 = scalar_lea.sflag [#allocation4], %s196
        %s198 = sand.u32 %s49, 1
        %s199 = smul.addr %s198, 16
        %s200 = scalar_lea.vmem [#allocation3], %s199
        %p201 = pneg %p62
        %p202 = pneg %p59
        %p203 = pneg %p90
        %p204 = pneg %p87
        %p205 = pneg %p118
        %p206 = pneg %p115
        %s207 = sand.u32 %s105, 1
        %s208 = scalar_lea.sflag [#allocation5], %s207
        %s209 = sand.u32 %s105, 1
        %s210 = smul.addr %s209, 8
        %s211 = scalar_lea.vmem [#allocation8], %s210
        %s212 = smul.u32 2, %s25
        %s213 = smul.u32 16, %s27
        %s214 = smul.u32 2, %s25
        %p216 = scmp.eq.s32.totalorder %s27, 0
        // Predicated region
        $region37: #{tpu_custom_call.1} parent=27 // pred_check
          %p217 = pneg %p216
        $region38: #{tpu_custom_call.1} parent=27 // pred_check_branch
          %219 = sbr.rel (%p217) target = $region40
        $region39: #{tpu_custom_call.1} parent=27 // pred_region
          %220 = vst [vmem:[#allocation2] sm:$0xff] 0.0
          %221 = vst [vmem:[#allocation2 + $0x8] sm:$0xff] 0.0
        $region40: #{tpu_custom_call.1} parent=27 // pred_fallthru
          _
        %v222 = vld [vmem:[#allocation2] sm:$0xff]
        %v223 = vld [vmem:[#allocation2 + $0x8] sm:$0xff]
        %v224 = vld [vmem:[%s187] sm:$0xff]
        %v225 = vld [vmem:[%s187 + $0x8] sm:$0xff]
        %v226 = vpack.c.bf16 %v225, %v224
        %v227 = vld [vmem:[#allocation6] sm:$0xf]
        %v228 = vld [vmem:[#allocation6 + $0x4] sm:$0xf]
        %v229 = vld [vmem:[#allocation6 + $0x8] sm:$0xf]
        %v230 = vld [vmem:[#allocation6 + $0xc] sm:$0xf]
        %v231 = vld [vmem:[#allocation6 + $0x10] sm:$0xf]
        %v232 = vld [vmem:[#allocation6 + $0x14] sm:$0xf]
        %v233 = vld [vmem:[#allocation6 + $0x18] sm:$0xf]
        %v234 = vld [vmem:[#allocation6 + $0x1c] sm:$0xf]
        %v235 = vld [vmem:[#allocation6 + $0x20] sm:$0xf]
        %v236 = vld [vmem:[#allocation6 + $0x24] sm:$0xf]
        %v237 = vld [vmem:[#allocation6 + $0x28] sm:$0xf]
        %v238 = vld [vmem:[#allocation6 + $0x2c] sm:$0xf]
        %v239 = vld [vmem:[#allocation6 + $0x30] sm:$0xf]
        %v240 = vld [vmem:[#allocation6 + $0x34] sm:$0xf]
        %v241 = vld [vmem:[#allocation6 + $0x38] sm:$0xf]
        %v242 = vld [vmem:[#allocation6 + $0x3c] sm:$0xf]
        %v259 = vunpack.c.l.b16 %v227
        %v260 = vunpack.c.l.b16 %v228
        %v261 = vunpack.c.l.b16 %v229
        %v262 = vunpack.c.l.b16 %v230
        %v263 = vunpack.c.l.b16 %v231
        %v264 = vunpack.c.l.b16 %v232
        %v265 = vunpack.c.l.b16 %v233
        %v266 = vunpack.c.l.b16 %v234
        %v267 = vunpack.c.l.b16 %v235
        %v268 = vunpack.c.l.b16 %v236
        %v269 = vunpack.c.l.b16 %v237
        %v270 = vunpack.c.l.b16 %v238
        %v271 = vunpack.c.l.b16 %v239
        %v272 = vunpack.c.l.b16 %v240
        %v273 = vunpack.c.l.b16 %v241
        %v274 = vunpack.c.l.b16 %v242
        %v275 = vpack.c.b16 %v260, %v259
        %v276 = vpack.c.b16 %v262, %v261
        %v277 = vpack.c.b16 %v264, %v263
        %v278 = vpack.c.b16 %v266, %v265
        %v279 = vpack.c.b16 %v268, %v267
        %v280 = vpack.c.b16 %v270, %v269
        %v281 = vpack.c.b16 %v272, %v271
        %v282 = vpack.c.b16 %v274, %v273
        %291 = vmatprep.subr.bf16.mxu0 0
        %292 = vmatpush1.bf16.msra.mxu0 %v275
        %293 = vmatprep.subr.bf16.mxu0 0
        %294 = vmatpush1.bf16.msra.mxu0 %v276
        %295 = vmatprep.subr.bf16.mxu0 0
        %296 = vmatpush1.bf16.msra.mxu0 %v277
        %297 = vmatprep.subr.bf16.mxu0 0
        %298 = vmatpush1.bf16.msra.mxu0 %v278
        %299 = vmatprep.subr.bf16.mxu0 0
        %300 = vmatpush1.bf16.msra.mxu0 %v279
        %301 = vmatprep.subr.bf16.mxu0 0
        %302 = vmatpush1.bf16.msra.mxu0 %v280
        %303 = vmatprep.subr.bf16.mxu0 0
        %304 = vmatpush1.bf16.msra.mxu0 %v281
        %305 = vmatprep.subr.bf16.mxu0 0
        %306 = vmatpush1.bf16.msra.mxu0 %v282
        %307 = vmatprep.subr.bf16.mxu0 0
        %308 = vmatpush1.bf16.msra.mxu0 0
        %309 = vmatprep.subr.bf16.mxu0 0
        %310 = vmatpush1.bf16.msra.mxu0 0
        %311 = vmatprep.subr.bf16.mxu0 0
        %312 = vmatpush1.bf16.msra.mxu0 0
        %313 = vmatprep.subr.bf16.mxu0 0
        %314 = vmatpush1.bf16.msra.mxu0 0
        %315 = vmatprep.subr.bf16.mxu0 0
        %316 = vmatpush1.bf16.msra.mxu0 0
        %317 = vmatprep.subr.bf16.mxu0 0
        %318 = vmatpush1.bf16.msra.mxu0 0
        %319 = vmatprep.subr.bf16.mxu0 0
        %320 = vmatpush1.bf16.msra.mxu0 0
        %321 = vmatprep.subr.bf16.mxu0 0
        %322 = vmatpush1.bf16.msra.mxu0 0
        %323 = vmatprep.mubr.bf16.mxu0 0
        %324 = vmatmul.mubr.bf16.gmra.mrb[0].mxu0 %v226
        %v325 = vpop.f32.mrb[0].mxu0
        %v326 = vadd.f32 0.0, %v325
        %v327 = vpop.f32.mrb[0].mxu0
        %v328 = vpop.f32.mrb[0].mxu0
        %v329 = vadd.f32 0.0, %v328
        %v330 = vpop.f32.mrb[0].mxu0
        %331 = vdwg.mxu0
        %v332 = vadd.f32 %v222, %v326
        %v333 = vadd.f32 %v223, %v329
        %334 = vst [vmem:[#allocation2] sm:$0xff] %v332
        %335 = vst [vmem:[#allocation2 + $0x8] sm:$0xff] %v333
        // Predicated region
        $region41: #{tpu_custom_call.1} parent=27 // pred_check
          %p336 = pneg %p216
        $region42: #{tpu_custom_call.1} parent=27 // pred_check_branch
          %338 = sbr.rel (%p336) target = $region44
        $region43: #{tpu_custom_call.1} parent=27 // pred_region
          %v339 = vld [vmem:[#allocation2] sm:$0xff]
          %v340 = vld [vmem:[#allocation2 + $0x8] sm:$0xff]
          %v341 = vpack.c.bf16 %v340, %v339
          %v343 = vunpack.c.l.b16 %v341
          %v344 = vunpack.c.h.b16 %v341
          %v345 = vpack.c.b16 %v343, %v343
          %v346 = vpack.c.b16 %v344, %v344
          %349 = vst [vmem:[%s211] sm:$0xf] %v345
          %350 = vst [vmem:[%s211 + $0x4] sm:$0xf] %v346
        $region44: #{tpu_custom_call.1} parent=27 // pred_fallthru
          _
        %s351 = sand.u32 %s105, 1
        %s352 = scalar_lea.sflag [#allocation5], %s351
        %s353 = sand.u32 %s105, 1
        %s354 = smul.addr %s353, 8
        %s355 = scalar_lea.vmem [#allocation8], %s354
        // Predicated region
        $region45: #{tpu_custom_call.1} parent=27 // pred_check
          %p356 = pneg %p115
        $region46: #{tpu_custom_call.1} parent=27 // pred_check_branch
          %358 = sbr.rel (%p356) target = $region48
        $region47: #{tpu_custom_call.1} parent=27 // pred_region
          %s359 = smul.u32 2, %s25
          %s361 = ssub.s32 128, 128
          %362 = vsyncadd %s352, %s361
          %s363 = sadd.s32 %s26, %s359
          %s364 = smul.addr %s363, 64
          %s365 = scalar_lea.hbm %s2, %s364
          %s366 = sshll.u32 %s355, 4
          %s367 = int_to_ptr.vmem [resolvable:$true] %s366
          %372 = dma.vmem_to_hbm [thread:$0]  %s367, 128, %s365, %s352, 64, 64, 4
        $region48: #{tpu_custom_call.1} parent=27 // pred_fallthru
          _
      $region28: #{tpu_custom_call.1} parent=5 // pred_fallthru
        _
      %p373 = scmp.le.s32.totalorder 2, %s15
      // Predicated region
      $region49: #{tpu_custom_call.1} parent=5 // pred_check
        %p374 = pneg %p373
      $region50: #{tpu_custom_call.1} parent=5 // pred_check_branch
        %376 = sbr.rel (%p374) target = $region52
      $region51: #{tpu_custom_call.1} parent=5 // pred_region
        %s377 = ssub.s32 %s15, 2
        // Predicated region
        $region53: #{tpu_custom_call.1} parent=51 // pred_check
          %p378 = pneg %p121
        $region54: #{tpu_custom_call.1} parent=51 // pred_check_branch
          %380 = sbr.rel (%p378) target = $region56
        $region55: #{tpu_custom_call.1} parent=51 // pred_region
          %s381 = sand.u32 %s106, 1
          %s382 = scalar_lea.sflag [#allocation5], %s381
          %s383 = sand.u32 %s106, 1
          %s384 = smul.addr %s383, 8
          %s385 = scalar_lea.vmem [#allocation8], %s384
          %386 = dma.done %s382, 128
        $region56: #{tpu_custom_call.1} parent=51 // pred_fallthru
          _
      $region52: #{tpu_custom_call.1} parent=5 // pred_fallthru
        _
    $region6: #{tpu_custom_call.1} parent=1 // loop_footer
      %s19 = sadd.s32 1, %s15
    $region7: #{tpu_custom_call.1} parent=1 // loop_footer_branch
      %14 = sbr.rel target = $region3
    $region8: #{tpu_custom_call.1} parent=1 // loop_exit
      _
    %387 = vsyncpa [#allocation4], 1
    %s388 = scalar_lea.sflag [#allocation4], 1
    %389 = vsyncpa %s388, 1
    %390 = vsyncpa [#allocation7], 1
    %391 = vsyncpa [#allocation5], 1
    %s392 = scalar_lea.sflag [#allocation5], 1
    %393 = vsyncpa %s392, 1

</llo_original>
